<compile_context>
chip_gen: v5e
topology: v5e:2x2
jax: 0.10.0
libtpu: 0.0.40
codegen_flags: <defaults>
</compile_context>

<pallas_src>
import functools
import math

import jax
import jax.numpy as jnp
from jax.experimental import pallas as pl
from jax.experimental.pallas import tpu as pltpu

IN_FEATURES = 4 * 200     # 800
OUT_FEATURES = 40


def _round_up(n, m):
    return ((n + m - 1) // m) * m


def _ceil_div(a, b):
    return (a + b - 1) // b


def _wf_linear_kernel(x_ref, w_ref, b_ref, o_ref):
    # x_ref: (TB, IN) f32   -> bf16 cast in-kernel (VPU cast hides under the DMA;
    #                          avoids a separate HBM round trip for the cast).
    # w_ref: (IN, OUT) bf16 grid-invariant, VMEM-resident.
    # b_ref: (1, OUT)  f32.
    # o_ref: (TB, OUT) f32  exact-width output (40 == full last dim, legal block).
    x_bf = x_ref[...].astype(jnp.bfloat16)
    acc = jnp.dot(x_bf, w_ref[...], preferred_element_type=jnp.float32)
    o_ref[...] = (acc + b_ref[...]).astype(o_ref.dtype)


def _pick_batch_tile(batch, block_b):
    """Batch tile size (multiple of 8 sublanes).

    When the whole batch would otherwise fit in <= 2 tiles, split it in two so the
    "parallel" grid axis has >= 2 steps and both TensorCores on v7x get work
    (costs one extra ~0.35us grid step on v5e/v6e, harmless).
    """
    rows8 = _round_up(max(batch, 1), 8)
    if batch <= 2 * block_b:
        tb = _round_up(_ceil_div(rows8, 2), 8)
    else:
        tb = _round_up(block_b, 8)
    return max(tb, 8)


@functools.partial(jax.jit, static_argnames=("block_b", "min_pallas_batch"))
def weight_freezing_forward(x, weight, bias, shared_weight, shared_mask,
                            multiple, *, block_b=1024, min_pallas_batch=0):
    """Pallas port of WeightFreezing.forward.

    x:             (B, in_features)              f32
    weight:        (out_features, in_features)   (torch nn.Linear layout)
    bias:          (out_features,)
    shared_weight: (in_features, out_features)
    shared_mask:   (in_features, out_features)   bool
    Semantics: out = x @ where(mask, shared_weight*multiple, weight.T) + bias
    """
    B, in_f = x.shape
    out_f = weight.shape[0]

    # Combined weight per module semantics (tiny; the where/scale/transpose/cast all
    # fuse under this jit). Bias stays f32 and is added post-accumulation.
    combined = jnp.where(shared_mask, shared_weight * multiple, weight.T)
    w_c = combined.astype(jnp.bfloat16)
    b_2d = bias.reshape(1, out_f).astype(jnp.float32)

    # Tiny-batch escape hatch: at a few rows the pallas_call is pure launch /
    # pipeline-priming overhead (set min_pallas_batch=~256 in production; kept at 0
    # here so the test below exercises the kernel).
    if B < min_pallas_batch:
        return x @ combined + bias

    tb = _pick_batch_tile(B, block_b)
    grid = (_ceil_div(B, tb),)   # ragged last tile: OOB rows are never written back

    cost = pl.CostEstimate(
        flops=2 * B * in_f * out_f,
        bytes_accessed=B * in_f * 4 + B * out_f * 4 + in_f * out_f * 2 + out_f * 4,
        transcendentals=0,
    )

    out = pl.pallas_call(
        _wf_linear_kernel,
        out_shape=jax.ShapeDtypeStruct((B, out_f), jnp.float32),
        grid=grid,
        in_specs=[
            pl.BlockSpec((tb, in_f), lambda i: (i, 0)),     # batch-tiled f32 x
            pl.BlockSpec((in_f, out_f), lambda i: (0, 0)),  # resident bf16 weight
            pl.BlockSpec((1, out_f), lambda i: (0, 0)),     # resident f32 bias
        ],
        out_specs=pl.BlockSpec((tb, out_f), lambda i: (i, 0)),  # exact (B, 40) out
        compiler_params=pltpu.CompilerParams(
            dimension_semantics=("parallel",)),  # shard batch tiles across TCs
        cost_estimate=cost,
    )(x, w_c, b_2d)

    return out


if __name__ == "__main__":
    key = jax.random.PRNGKey(0)
    k_w, k_b, k_s, k_m, k_x = jax.random.split(key, 5)

    # Deterministic synthetic parameters (shapes from WeightFreezing(800, 40)).
    bound = 1.0 / math.sqrt(IN_FEATURES)
    weight = jax.random.uniform(
        k_w, (OUT_FEATURES, IN_FEATURES), jnp.float32, -bound, bound)
    bias = jax.random.uniform(k_b, (OUT_FEATURES,), jnp.float32, -bound, bound)
    shared_weight = bound * jax.random.normal(
        k_s, (IN_FEATURES, OUT_FEATURES), jnp.float32)
    shared_mask = jax.random.uniform(
        k_m, (IN_FEATURES, OUT_FEATURES), jnp.float32) < 0.3
    multiple = 0.5

    def reference(x):
        combined = jnp.where(shared_mask, shared_weight * multiple, weight.T)
        # Match the kernel's bf16-input / f32-accumulate numerics.
        xb = x.astype(jnp.bfloat16).astype(jnp.float32)
        wb = combined.astype(jnp.bfloat16).astype(jnp.float32)
        return jnp.dot(xb, wb, precision=jax.lax.Precision.HIGHEST) + bias

    # (batch, block_b): tiny single-tile case, forced 2-tile split (v7x megacore
    # path), and a multi-tile case with a ragged final tile.
    for batch, tb in ((2, 1024), (520, 1024), (300, 128)):
        x = jax.random.normal(
            jax.random.fold_in(k_x, batch), (batch, IN_FEATURES), jnp.float32)
        out = weight_freezing_forward(
            x, weight, bias, shared_weight, shared_mask, multiple, block_b=tb)
        out = jax.block_until_ready(out)
        assert out.shape == (batch, OUT_FEATURES)
        ref = reference(x)
        assert jnp.allclose(out, ref, atol=5e-3, rtol=5e-3), float(
            jnp.max(jnp.abs(out - ref)))

    print("KERNEL_OK")
</pallas_src>

<mosaic_0001>
module attributes {stable_mosaic.version = 11 : i64} {
  func.func @_wf_linear_kernel(%arg0: i32, %arg1: memref<8x800xf32, #tpu.memory_space<vmem>>, %arg2: memref<800x40xbf16, #tpu.memory_space<vmem>>, %arg3: memref<1x40xf32, #tpu.memory_space<vmem>>, %arg4: memref<8x40xf32, #tpu.memory_space<vmem>>) attributes {dimension_semantics = [#tpu.dimension_semantics<parallel>], iteration_bounds = array<i64: 1>, scalar_prefetch = 0 : i64, scratch_operands = 0 : i64, tpu.core_type = #tpu.core_type<tc>, window_params = [{transform_indices = @transform_0, window_bounds = array<i64: 8, 800>}, {pipeline_mode = #tpu.pipeline_mode<synchronous>, transform_indices = @transform_1, window_bounds = array<i64: 800, 40>}, {pipeline_mode = #tpu.pipeline_mode<synchronous>, transform_indices = @transform_2, window_bounds = array<i64: 1, 40>}, {transform_indices = @transform_3, window_bounds = array<i64: 8, 40>}]} {
    %c0 = arith.constant 0 : index
    %c0_0 = arith.constant 0 : index
    %0 = vector.load %arg1[%c0, %c0_0] : memref<8x800xf32, #tpu.memory_space<vmem>>, vector<8x800xf32>
    %1 = arith.truncf %0 : vector<8x800xf32> to vector<8x800xbf16>
    %c0_1 = arith.constant 0 : index
    %c0_2 = arith.constant 0 : index
    %2 = vector.load %arg2[%c0_1, %c0_2] : memref<800x40xbf16, #tpu.memory_space<vmem>>, vector<800x40xbf16>
    %cst = arith.constant dense<0.000000e+00> : vector<8x40xf32>
    %3 = tpu.matmul %1, %2, %cst {dimension_numbers = #tpu.dot_dimension_numbers<[1], [0], [0], [1], [0, 0, 1, 1], [], []>} : vector<8x800xbf16>, vector<800x40xbf16>, vector<8x40xf32> -> vector<8x40xf32>
    %c0_3 = arith.constant 0 : index
    %c0_4 = arith.constant 0 : index
    %4 = vector.load %arg3[%c0_3, %c0_4] : memref<1x40xf32, #tpu.memory_space<vmem>>, vector<1x40xf32>
    %5 = vector.broadcast %4 : vector<1x40xf32> to vector<8x40xf32>
    %6 = arith.addf %3, %5 : vector<8x40xf32>
    %c0_5 = arith.constant 0 : index
    %c0_6 = arith.constant 0 : index
    %7 = vector.load %arg4[%c0_5, %c0_6] : memref<8x40xf32, #tpu.memory_space<vmem>>, vector<8x40xf32>
    tpu.vector_store %arg4[%c0_5, %c0_6], %6 {strides = array<i32>} : memref<8x40xf32, #tpu.memory_space<vmem>>, vector<8x40xf32>,
    return
  }
  func.func @transform_0(%arg0: i32) -> (i32, i32) {
    %c0_i32 = arith.constant 0 : i32
    %c0_i32_0 = arith.constant 0 : i32
    return %arg0, %c0_i32 : i32, i32
  }
  func.func @transform_1(%arg0: i32) -> (i32, i32) {
    %c0_i32 = arith.constant 0 : i32
    %c0_i32_0 = arith.constant 0 : i32
    %c0_i32_1 = arith.constant 0 : i32
    return %c0_i32, %c0_i32_0 : i32, i32
  }
  func.func @transform_2(%arg0: i32) -> (i32, i32) {
    %c0_i32 = arith.constant 0 : i32
    %c0_i32_0 = arith.constant 0 : i32
    %c0_i32_1 = arith.constant 0 : i32
    return %c0_i32, %c0_i32_0 : i32, i32
  }
  func.func @transform_3(%arg0: i32) -> (i32, i32) {
    %c0_i32 = arith.constant 0 : i32
    %c0_i32_0 = arith.constant 0 : i32
    return %arg0, %c0_i32 : i32, i32
  }
}

</mosaic_0001>

<llo_original>
// kernel: weight_freezing_forward.1
$region0: #{weight_freezing_forward.1}
  #allocation0 [shape = 'u32[]', space=smem, size = 0x4, offset = 0x4, fixed_abs, tag = 'smem constant byte address 0x4 - core index']
  #allocation1 [shape = 'u32[72,128]{1,0:T(1,128)}', space=vmem, size = 0x9000, scoped, tag = 'internal scratch']
  %s0 = inlined_call_operand.vmem [shape: f32[2,800], index: 0, kind: input, shape index: {}]
  %s1 = inlined_call_operand.vmem [shape: bf16[800,40], index: 1, kind: input, shape index: {}]
  %s2 = inlined_call_operand.vmem [shape: f32[1,40], index: 2, kind: input, shape index: {}]
  %s3 = inlined_call_operand.hbm [shape: f32[2,40], index: 3, kind: output, shape index: {}]
  %s4 = sld [smem:[#allocation0]]
  $region22: #{weight_freezing_forward.1} parent=0
    _
  %s6 = ssub.s32 1, %s4
  %s7 = scalar_select 0, %s6, %s4
  $region1: #{weight_freezing_forward.1} parent=0
    #allocation2 [shape = 'u8[4096]{0}', space=vmem, size = 0x1000, scoped, tag = 'output window, operand 0, single buffered']
    #allocation3 [shape = 's32[1]{0}', space=sflag, size = 0x4, scoped, tag = 'scoped memory for weight_freezing_forward.1']
    %8 = vsyncpa [#allocation3], 0
    // Predicated region
    $region2: #{weight_freezing_forward.1} parent=1 // pred_check
      _
    $region3: #{weight_freezing_forward.1} parent=1 // pred_check_branch
      %10 = sbr.rel (0) target = $region5
    $region4: #{weight_freezing_forward.1} parent=1 // pred_region
      _
    $region5: #{weight_freezing_forward.1} parent=1 // pred_fallthru
      _
    // Predicated region
    $region6: #{weight_freezing_forward.1} parent=1 // pred_check
      _
    $region7: #{weight_freezing_forward.1} parent=1 // pred_check_branch
      %12 = sbr.rel (0) target = $region9
    $region8: #{weight_freezing_forward.1} parent=1 // pred_region
      _
    $region9: #{weight_freezing_forward.1} parent=1 // pred_fallthru
      _
    // Predicated region
    $region10: #{weight_freezing_forward.1} parent=1 // pred_check
      _
    $region11: #{weight_freezing_forward.1} parent=1 // pred_check_branch
      %14 = sbr.rel (0) target = $region13
    $region12: #{weight_freezing_forward.1} parent=1 // pred_region
      _
    $region13: #{weight_freezing_forward.1} parent=1 // pred_fallthru
      _
    %v16 = vld [vmem:[%s0] sm:$0xff]
    %v17 = vld [vmem:[%s0 + $0x8] sm:$0x3f]
    %v18 = vld [vmem:[%s0 + $0xe] sm:$0xff]
    %v19 = vld [vmem:[%s0 + $0x16] sm:$0x3f]
    %v20 = vld [vmem:[%s0 + $0x1c] sm:$0xff]
    %v21 = vld [vmem:[%s0 + $0x24] sm:$0x3f]
    %v22 = vld [vmem:[%s0 + $0x2a] sm:$0xff]
    %v23 = vld [vmem:[%s0 + $0x32] sm:$0x3f]
    %32 = vst [vmem:[#allocation1] ss:$4 sm:$0xff] %v16
    %s33 = scalar_lea.vmem [#allocation1], 1
    %34 = vst [vmem:[%s33] ss:$4 sm:$0xff] %v18
    %s35 = scalar_lea.vmem [#allocation1], 2
    %36 = vst [vmem:[%s35] ss:$4 sm:$0xff] %v20
    %s37 = scalar_lea.vmem [#allocation1], 3
    %38 = vst [vmem:[%s37] ss:$4 sm:$0xff] %v22
    %s39 = scalar_lea.vmem [#allocation1], 32
    %40 = vst [vmem:[%s39] ss:$4 sm:$0xff] %v17
    %s41 = scalar_lea.vmem [#allocation1], 33
    %42 = vst [vmem:[%s41] ss:$4 sm:$0xff] %v19
    %s43 = scalar_lea.vmem [#allocation1], 34
    %44 = vst [vmem:[%s43] ss:$4 sm:$0xff] %v21
    %s45 = scalar_lea.vmem [#allocation1], 35
    %46 = vst [vmem:[%s45] ss:$4 sm:$0xff] %v23
    %v47 = vld.sshfl [vmem:[#allocation1] sm:$0xff pattern:$0x73625140]
    %v48 = vld.sshfl [vmem:[#allocation1 + $0x8] sm:$0xff pattern:$0x73625140]
    %v49 = vld.sshfl [vmem:[#allocation1 + $0x10] sm:$0xff pattern:$0x73625140]
    %v50 = vld.sshfl [vmem:[#allocation1 + $0x18] sm:$0xff pattern:$0x73625140]
    %v51 = vld.sshfl [vmem:[#allocation1 + $0x20] sm:$0xff pattern:$0x73625140]
    %v52 = vld.sshfl [vmem:[#allocation1 + $0x28] sm:$0xff pattern:$0x73625140]
    %v53 = vld.sshfl [vmem:[#allocation1 + $0x30] sm:$0xff pattern:$0x73625140]
    %v61 = vpack.c.bf16 %v47, %v47
    %v62 = vpack.c.bf16 %v48, %v48
    %v63 = vpack.c.bf16 %v49, %v49
    %v64 = vpack.c.bf16 %v50, %v50
    %v65 = vpack.c.bf16 %v51, %v51
    %v66 = vpack.c.bf16 %v52, %v52
    %v67 = vpack.c.bf16 %v53, %v53
    %v68 = vld [vmem:[%s1] sm:$0xf]
    %v69 = vld [vmem:[%s1 + $0x4] sm:$0xf]
    %v70 = vld [vmem:[%s1 + $0x8] sm:$0xf]
    %v71 = vld [vmem:[%s1 + $0xc] sm:$0xf]
    %v72 = vld [vmem:[%s1 + $0x10] sm:$0xf]
    %v73 = vld [vmem:[%s1 + $0x14] sm:$0xf]
    %v74 = vld [vmem:[%s1 + $0x18] sm:$0xf]
    %v75 = vld [vmem:[%s1 + $0x1c] sm:$0xf]
    %v76 = vld [vmem:[%s1 + $0x20] sm:$0xf]
    %v77 = vld [vmem:[%s1 + $0x24] sm:$0xf]
    %v78 = vld [vmem:[%s1 + $0x28] sm:$0xf]
    %v79 = vld [vmem:[%s1 + $0x2c] sm:$0xf]
    %v80 = vld [vmem:[%s1 + $0x30] sm:$0xf]
    %v81 = vld [vmem:[%s1 + $0x34] sm:$0xf]
    %v82 = vld [vmem:[%s1 + $0x38] sm:$0xf]
    %v83 = vld [vmem:[%s1 + $0x3c] sm:$0xf]
    %v84 = vld [vmem:[%s1 + $0x40] sm:$0xf]
    %v85 = vld [vmem:[%s1 + $0x44] sm:$0xf]
    %v86 = vld [vmem:[%s1 + $0x48] sm:$0xf]
    %v87 = vld [vmem:[%s1 + $0x4c] sm:$0xf]
    %v88 = vld [vmem:[%s1 + $0x50] sm:$0xf]
    %v89 = vld [vmem:[%s1 + $0x54] sm:$0xf]
    %v90 = vld [vmem:[%s1 + $0x58] sm:$0xf]
    %v91 = vld [vmem:[%s1 + $0x5c] sm:$0xf]
    %v92 = vld [vmem:[%s1 + $0x60] sm:$0xf]
    %v93 = vld [vmem:[%s1 + $0x64] sm:$0xf]
    %v94 = vld [vmem:[%s1 + $0x68] sm:$0xf]
    %v95 = vld [vmem:[%s1 + $0x6c] sm:$0xf]
    %v96 = vld [vmem:[%s1 + $0x70] sm:$0xf]
    %v97 = vld [vmem:[%s1 + $0x74] sm:$0xf]
    %v98 = vld [vmem:[%s1 + $0x78] sm:$0xf]
    %v99 = vld [vmem:[%s1 + $0x7c] sm:$0xf]
    %v100 = vld [vmem:[%s1 + $0x80] sm:$0xf]
    %v101 = vld [vmem:[%s1 + $0x84] sm:$0xf]
    %v102 = vld [vmem:[%s1 + $0x88] sm:$0xf]
    %v103 = vld [vmem:[%s1 + $0x8c] sm:$0xf]
    %v104 = vld [vmem:[%s1 + $0x90] sm:$0xf]
    %v105 = vld [vmem:[%s1 + $0x94] sm:$0xf]
    %v106 = vld [vmem:[%s1 + $0x98] sm:$0xf]
    %v107 = vld [vmem:[%s1 + $0x9c] sm:$0xf]
    %v108 = vld [vmem:[%s1 + $0xa0] sm:$0xf]
    %v109 = vld [vmem:[%s1 + $0xa4] sm:$0xf]
    %v110 = vld [vmem:[%s1 + $0xa8] sm:$0xf]
    %v111 = vld [vmem:[%s1 + $0xac] sm:$0xf]
    %v112 = vld [vmem:[%s1 + $0xb0] sm:$0xf]
    %v113 = vld [vmem:[%s1 + $0xb4] sm:$0xf]
    %v114 = vld [vmem:[%s1 + $0xb8] sm:$0xf]
    %v115 = vld [vmem:[%s1 + $0xbc] sm:$0xf]
    %v116 = vld [vmem:[%s1 + $0xc0] sm:$0xf]
    %v117 = vld [vmem:[%s1 + $0xc4] sm:$0xf]
    %v118 = vld [vmem:[%s1 + $0xc8] sm:$0xf]
    %v119 = vld [vmem:[%s1 + $0xcc] sm:$0xf]
    %v120 = vld [vmem:[%s1 + $0xd0] sm:$0xf]
    %v121 = vld [vmem:[%s1 + $0xd4] sm:$0xf]
    %v122 = vld [vmem:[%s1 + $0xd8] sm:$0xf]
    %v123 = vld [vmem:[%s1 + $0xdc] sm:$0xf]
    %v124 = vld [vmem:[%s1 + $0xe0] sm:$0xf]
    %v125 = vld [vmem:[%s1 + $0xe4] sm:$0xf]
    %v126 = vld [vmem:[%s1 + $0xe8] sm:$0xf]
    %v127 = vld [vmem:[%s1 + $0xec] sm:$0xf]
    %v128 = vld [vmem:[%s1 + $0xf0] sm:$0xf]
    %v129 = vld [vmem:[%s1 + $0xf4] sm:$0xf]
    %v130 = vld [vmem:[%s1 + $0xf8] sm:$0xf]
    %v131 = vld [vmem:[%s1 + $0xfc] sm:$0xf]
    %v132 = vld [vmem:[%s1 + $0x100] sm:$0xf]
    %v133 = vld [vmem:[%s1 + $0x104] sm:$0xf]
    %v134 = vld [vmem:[%s1 + $0x108] sm:$0xf]
    %v135 = vld [vmem:[%s1 + $0x10c] sm:$0xf]
    %v136 = vld [vmem:[%s1 + $0x110] sm:$0xf]
    %v137 = vld [vmem:[%s1 + $0x114] sm:$0xf]
    %v138 = vld [vmem:[%s1 + $0x118] sm:$0xf]
    %v139 = vld [vmem:[%s1 + $0x11c] sm:$0xf]
    %v140 = vld [vmem:[%s1 + $0x120] sm:$0xf]
    %v141 = vld [vmem:[%s1 + $0x124] sm:$0xf]
    %v142 = vld [vmem:[%s1 + $0x128] sm:$0xf]
    %v143 = vld [vmem:[%s1 + $0x12c] sm:$0xf]
    %v144 = vld [vmem:[%s1 + $0x130] sm:$0xf]
    %v145 = vld [vmem:[%s1 + $0x134] sm:$0xf]
    %v146 = vld [vmem:[%s1 + $0x138] sm:$0xf]
    %v147 = vld [vmem:[%s1 + $0x13c] sm:$0xf]
    %v148 = vld [vmem:[%s1 + $0x140] sm:$0xf]
    %v149 = vld [vmem:[%s1 + $0x144] sm:$0xf]
    %v150 = vld [vmem:[%s1 + $0x148] sm:$0xf]
    %v151 = vld [vmem:[%s1 + $0x14c] sm:$0xf]
    %v152 = vld [vmem:[%s1 + $0x150] sm:$0xf]
    %v153 = vld [vmem:[%s1 + $0x154] sm:$0xf]
    %v154 = vld [vmem:[%s1 + $0x158] sm:$0xf]
    %v155 = vld [vmem:[%s1 + $0x15c] sm:$0xf]
    %v156 = vld [vmem:[%s1 + $0x160] sm:$0xf]
    %v157 = vld [vmem:[%s1 + $0x164] sm:$0xf]
    %v158 = vld [vmem:[%s1 + $0x168] sm:$0xf]
    %v159 = vld [vmem:[%s1 + $0x16c] sm:$0xf]
    %v160 = vld [vmem:[%s1 + $0x170] sm:$0xf]
    %v161 = vld [vmem:[%s1 + $0x174] sm:$0xf]
    %v162 = vld [vmem:[%s1 + $0x178] sm:$0xf]
    %v163 = vld [vmem:[%s1 + $0x17c] sm:$0xf]
    %v164 = vld [vmem:[%s1 + $0x180] sm:$0xf]
    %v165 = vld [vmem:[%s1 + $0x184] sm:$0xf]
    %v166 = vld [vmem:[%s1 + $0x188] sm:$0xf]
    %v167 = vld [vmem:[%s1 + $0x18c] sm:$0xf]
    %v168 = vld [vmem:[%s2] sm:$0x1]
    %v170 = vperm.slane %v168, 0
    %v272 = vunpack.c.l.b16 %v68
    %v273 = vunpack.c.l.b16 %v69
    %v274 = vunpack.c.l.b16 %v70
    %v275 = vunpack.c.l.b16 %v71
    %v276 = vunpack.c.l.b16 %v72
    %v277 = vunpack.c.l.b16 %v73
    %v278 = vunpack.c.l.b16 %v74
    %v279 = vunpack.c.l.b16 %v75
    %v280 = vunpack.c.l.b16 %v76
    %v281 = vunpack.c.l.b16 %v77
    %v282 = vunpack.c.l.b16 %v78
    %v283 = vunpack.c.l.b16 %v79
    %v284 = vunpack.c.l.b16 %v80
    %v285 = vunpack.c.l.b16 %v81
    %v286 = vunpack.c.l.b16 %v82
    %v287 = vunpack.c.l.b16 %v83
    %v288 = vunpack.c.l.b16 %v84
    %v289 = vunpack.c.l.b16 %v85
    %v290 = vunpack.c.l.b16 %v86
    %v291 = vunpack.c.l.b16 %v87
    %v292 = vunpack.c.l.b16 %v88
    %v293 = vunpack.c.l.b16 %v89
    %v294 = vunpack.c.l.b16 %v90
    %v295 = vunpack.c.l.b16 %v91
    %v296 = vunpack.c.l.b16 %v92
    %v297 = vunpack.c.l.b16 %v93
    %v298 = vunpack.c.l.b16 %v94
    %v299 = vunpack.c.l.b16 %v95
    %v300 = vunpack.c.l.b16 %v96
    %v301 = vunpack.c.l.b16 %v97
    %v302 = vunpack.c.l.b16 %v98
    %v303 = vunpack.c.l.b16 %v99
    %v304 = vunpack.c.l.b16 %v100
    %v305 = vunpack.c.l.b16 %v101
    %v306 = vunpack.c.l.b16 %v102
    %v307 = vunpack.c.l.b16 %v103
    %v308 = vunpack.c.l.b16 %v104
    %v309 = vunpack.c.l.b16 %v105
    %v310 = vunpack.c.l.b16 %v106
    %v311 = vunpack.c.l.b16 %v107
    %v312 = vunpack.c.l.b16 %v108
    %v313 = vunpack.c.l.b16 %v109
    %v314 = vunpack.c.l.b16 %v110
    %v315 = vunpack.c.l.b16 %v111
    %v316 = vunpack.c.l.b16 %v112
    %v317 = vunpack.c.l.b16 %v113
    %v318 = vunpack.c.l.b16 %v114
    %v319 = vunpack.c.l.b16 %v115
    %v320 = vunpack.c.l.b16 %v116
    %v321 = vunpack.c.l.b16 %v117
    %v322 = vunpack.c.l.b16 %v118
    %v323 = vunpack.c.l.b16 %v119
    %v324 = vunpack.c.l.b16 %v120
    %v325 = vunpack.c.l.b16 %v121
    %v326 = vunpack.c.l.b16 %v122
    %v327 = vunpack.c.l.b16 %v123
    %v328 = vunpack.c.l.b16 %v124
    %v329 = vunpack.c.l.b16 %v125
    %v330 = vunpack.c.l.b16 %v126
    %v331 = vunpack.c.l.b16 %v127
    %v332 = vunpack.c.l.b16 %v128
    %v333 = vunpack.c.l.b16 %v129
    %v334 = vunpack.c.l.b16 %v130
    %v335 = vunpack.c.l.b16 %v131
    %v336 = vunpack.c.l.b16 %v132
    %v337 = vunpack.c.l.b16 %v133
    %v338 = vunpack.c.l.b16 %v134
    %v339 = vunpack.c.l.b16 %v135
    %v340 = vunpack.c.l.b16 %v136
    %v341 = vunpack.c.l.b16 %v137
    %v342 = vunpack.c.l.b16 %v138
    %v343 = vunpack.c.l.b16 %v139
    %v344 = vunpack.c.l.b16 %v140
    %v345 = vunpack.c.l.b16 %v141
    %v346 = vunpack.c.l.b16 %v142
    %v347 = vunpack.c.l.b16 %v143
    %v348 = vunpack.c.l.b16 %v144
    %v349 = vunpack.c.l.b16 %v145
    %v350 = vunpack.c.l.b16 %v146
    %v351 = vunpack.c.l.b16 %v147
    %v352 = vunpack.c.l.b16 %v148
    %v353 = vunpack.c.l.b16 %v149
    %v354 = vunpack.c.l.b16 %v150
    %v355 = vunpack.c.l.b16 %v151
    %v356 = vunpack.c.l.b16 %v152
    %v357 = vunpack.c.l.b16 %v153
    %v358 = vunpack.c.l.b16 %v154
    %v359 = vunpack.c.l.b16 %v155
    %v360 = vunpack.c.l.b16 %v156
    %v361 = vunpack.c.l.b16 %v157
    %v362 = vunpack.c.l.b16 %v158
    %v363 = vunpack.c.l.b16 %v159
    %v364 = vunpack.c.l.b16 %v160
    %v365 = vunpack.c.l.b16 %v161
    %v366 = vunpack.c.l.b16 %v162
    %v367 = vunpack.c.l.b16 %v163
    %v368 = vunpack.c.l.b16 %v164
    %v369 = vunpack.c.l.b16 %v165
    %v370 = vunpack.c.l.b16 %v166
    %v371 = vunpack.c.l.b16 %v167
    %v372 = vpack.c.b16 %v273, %v272
    %v373 = vpack.c.b16 %v275, %v274
    %v374 = vpack.c.b16 %v277, %v276
    %v375 = vpack.c.b16 %v279, %v278
    %v376 = vpack.c.b16 %v281, %v280
    %v377 = vpack.c.b16 %v283, %v282
    %v378 = vpack.c.b16 %v285, %v284
    %v379 = vpack.c.b16 %v287, %v286
    %v380 = vpack.c.b16 %v289, %v288
    %v381 = vpack.c.b16 %v291, %v290
    %v382 = vpack.c.b16 %v293, %v292
    %v383 = vpack.c.b16 %v295, %v294
    %v384 = vpack.c.b16 %v297, %v296
    %v385 = vpack.c.b16 %v299, %v298
    %v386 = vpack.c.b16 %v301, %v300
    %v387 = vpack.c.b16 %v303, %v302
    %v388 = vpack.c.b16 %v305, %v304
    %v389 = vpack.c.b16 %v307, %v306
    %v390 = vpack.c.b16 %v309, %v308
    %v391 = vpack.c.b16 %v311, %v310
    %v392 = vpack.c.b16 %v313, %v312
    %v393 = vpack.c.b16 %v315, %v314
    %v394 = vpack.c.b16 %v317, %v316
    %v395 = vpack.c.b16 %v319, %v318
    %v396 = vpack.c.b16 %v321, %v320
    %v397 = vpack.c.b16 %v323, %v322
    %v398 = vpack.c.b16 %v325, %v324
    %v399 = vpack.c.b16 %v327, %v326
    %v400 = vpack.c.b16 %v329, %v328
    %v401 = vpack.c.b16 %v331, %v330
    %v402 = vpack.c.b16 %v333, %v332
    %v403 = vpack.c.b16 %v335, %v334
    %v404 = vpack.c.b16 %v337, %v336
    %v405 = vpack.c.b16 %v339, %v338
    %v406 = vpack.c.b16 %v341, %v340
    %v407 = vpack.c.b16 %v343, %v342
    %v408 = vpack.c.b16 %v345, %v344
    %v409 = vpack.c.b16 %v347, %v346
    %v410 = vpack.c.b16 %v349, %v348
    %v411 = vpack.c.b16 %v351, %v350
    %v412 = vpack.c.b16 %v353, %v352
    %v413 = vpack.c.b16 %v355, %v354
    %v414 = vpack.c.b16 %v357, %v356
    %v415 = vpack.c.b16 %v359, %v358
    %v416 = vpack.c.b16 %v361, %v360
    %v417 = vpack.c.b16 %v363, %v362
    %v418 = vpack.c.b16 %v365, %v364
    %v419 = vpack.c.b16 %v367, %v366
    %v420 = vpack.c.b16 %v369, %v368
    %v421 = vpack.c.b16 %v371, %v370
    %vm472 = vcmask 261120
    %v474 = vsel %vm472, %v67, 0
    %476 = vmatpush.bf16.msra.mxu0 %v379
    %477 = vmatpush.bf16.msra.mxu0 %v378
    %478 = vmatpush.bf16.msra.mxu0 %v377
    %479 = vmatpush.bf16.msra.mxu0 %v376
    %480 = vmatpush.bf16.msra.mxu0 %v375
    %481 = vmatpush.bf16.msra.mxu0 %v374
    %482 = vmatpush.bf16.msra.mxu0 %v373
    %483 = vmatpush.bf16.msra.mxu0 %v372
    %484 = vmatmul.bf16.gmra.mxu0 %v61
    %v485 = vpop.f32.mrf.mxu0
    %v486 = vadd.f32 %v170, %v485
    %v487 = vpop.f32.mrf.mxu0
    %488 = vdwg.mxu0
    %489 = vmatpush.bf16.msra.mxu0 %v387
    %490 = vmatpush.bf16.msra.mxu0 %v386
    %491 = vmatpush.bf16.msra.mxu0 %v385
    %492 = vmatpush.bf16.msra.mxu0 %v384
    %493 = vmatpush.bf16.msra.mxu0 %v383
    %494 = vmatpush.bf16.msra.mxu0 %v382
    %495 = vmatpush.bf16.msra.mxu0 %v381
    %496 = vmatpush.bf16.msra.mxu0 %v380
    %497 = vmatmul.bf16.gmra.mxu0 %v62
    %v498 = vpop.f32.mrf.mxu0
    %v499 = vadd.f32 %v486, %v498
    %v500 = vpop.f32.mrf.mxu0
    %501 = vdwg.mxu0
    %502 = vmatpush.bf16.msra.mxu0 %v395
    %503 = vmatpush.bf16.msra.mxu0 %v394
    %504 = vmatpush.bf16.msra.mxu0 %v393
    %505 = vmatpush.bf16.msra.mxu0 %v392
    %506 = vmatpush.bf16.msra.mxu0 %v391
    %507 = vmatpush.bf16.msra.mxu0 %v390
    %508 = vmatpush.bf16.msra.mxu0 %v389
    %509 = vmatpush.bf16.msra.mxu0 %v388
    %510 = vmatmul.bf16.gmra.mxu0 %v63
    %v511 = vpop.f32.mrf.mxu0
    %v512 = vadd.f32 %v499, %v511
    %v513 = vpop.f32.mrf.mxu0
    %514 = vdwg.mxu0
    %515 = vmatpush.bf16.msra.mxu0 %v403
    %516 = vmatpush.bf16.msra.mxu0 %v402
    %517 = vmatpush.bf16.msra.mxu0 %v401
    %518 = vmatpush.bf16.msra.mxu0 %v400
    %519 = vmatpush.bf16.msra.mxu0 %v399
    %520 = vmatpush.bf16.msra.mxu0 %v398
    %521 = vmatpush.bf16.msra.mxu0 %v397
    %522 = vmatpush.bf16.msra.mxu0 %v396
    %523 = vmatmul.bf16.gmra.mxu0 %v64
    %v524 = vpop.f32.mrf.mxu0
    %v525 = vadd.f32 %v512, %v524
    %v526 = vpop.f32.mrf.mxu0
    %527 = vdwg.mxu0
    %528 = vmatpush.bf16.msra.mxu0 %v411
    %529 = vmatpush.bf16.msra.mxu0 %v410
    %530 = vmatpush.bf16.msra.mxu0 %v409
    %531 = vmatpush.bf16.msra.mxu0 %v408
    %532 = vmatpush.bf16.msra.mxu0 %v407
    %533 = vmatpush.bf16.msra.mxu0 %v406
    %534 = vmatpush.bf16.msra.mxu0 %v405
    %535 = vmatpush.bf16.msra.mxu0 %v404
    %536 = vmatmul.bf16.gmra.mxu0 %v65
    %v537 = vpop.f32.mrf.mxu0
    %v538 = vadd.f32 %v525, %v537
    %v539 = vpop.f32.mrf.mxu0
    %540 = vdwg.mxu0
    %541 = vmatpush.bf16.msra.mxu0 %v419
    %542 = vmatpush.bf16.msra.mxu0 %v418
    %543 = vmatpush.bf16.msra.mxu0 %v417
    %544 = vmatpush.bf16.msra.mxu0 %v416
    %545 = vmatpush.bf16.msra.mxu0 %v415
    %546 = vmatpush.bf16.msra.mxu0 %v414
    %547 = vmatpush.bf16.msra.mxu0 %v413
    %548 = vmatpush.bf16.msra.mxu0 %v412
    %549 = vmatmul.bf16.gmra.mxu0 %v66
    %v550 = vpop.f32.mrf.mxu0
    %v551 = vadd.f32 %v538, %v550
    %v552 = vpop.f32.mrf.mxu0
    %553 = vdwg.mxu0
    %554 = vmatpush.bf16.msra.mxu0 0
    %555 = vmatpush.bf16.msra.mxu0 0
    %556 = vmatpush.bf16.msra.mxu0 0
    %557 = vmatpush.bf16.msra.mxu0 0
    %558 = vmatpush.bf16.msra.mxu0 0
    %559 = vmatpush.bf16.msra.mxu0 0
    %560 = vmatpush.bf16.msra.mxu0 %v421
    %561 = vmatpush.bf16.msra.mxu0 %v420
    %562 = vmatmul.bf16.gmra.mxu0 %v474
    %v563 = vpop.f32.mrf.mxu0
    %v564 = vadd.f32 %v551, %v563
    %v565 = vpop.f32.mrf.mxu0
    %566 = vdwg.mxu0
    %vm567 = vcmask 326656
    %568 = vst.msk [vmem:[#allocation2] sm:$0xff] %vm567, %v564
    // Predicated region
    $region14: #{weight_freezing_forward.1} parent=1 // pred_check
      _
    $region15: #{weight_freezing_forward.1} parent=1 // pred_check_branch
      %570 = sbr.rel (0) target = $region17
    $region16: #{weight_freezing_forward.1} parent=1 // pred_region
      %572 = vsyncadd [#allocation3], 96
      %s573 = sshll.u32 [#allocation2], 4
      %s574 = int_to_ptr.vmem [resolvable:$true] %s573
      %s575 = sshll.u32 %s3, 4
      %s576 = int_to_ptr.hbm [resolvable:$true] %s575
      %581 = dma.vmem_to_hbm [thread:$0]  %s574, 32, %s576, [#allocation3], 32, 32, 2
    $region17: #{weight_freezing_forward.1} parent=1 // pred_fallthru
      _
    // Predicated region
    $region18: #{weight_freezing_forward.1} parent=1 // pred_check
      _
    $region19: #{weight_freezing_forward.1} parent=1 // pred_check_branch
      %583 = sbr.rel (0) target = $region21
    $region20: #{weight_freezing_forward.1} parent=1 // pred_region
      %585 = dma.done [#allocation3], 128
    $region21: #{weight_freezing_forward.1} parent=1 // pred_fallthru
      _
    %586 = vsyncpa [#allocation3], 1

</llo_original>
